<compile_context>
chip_gen: v5e
topology: v5e:2x2
jax: 0.10.0
libtpu: 0.0.40
codegen_flags: <defaults>
</compile_context>

<pallas_src>
import jax
import jax.numpy as jnp
from jax.experimental import pallas as pl
from jax.experimental.pallas import tpu as pltpu


def _readiness_kernel(w_ref, b_ref, xT_ref, outT_ref):
    """w_ref: (F_IN,) f32 SMEM; b_ref: (1,) f32 SMEM;
    xT_ref: (F_IN, TB) f32 VMEM (batch on lanes); outT_ref: (1, TB) f32 VMEM."""
    x = xT_ref[...]                                   # (F_IN, TB)
    f_in = x.shape[0]
    # Bias folded into the first broadcast FMA; rest statically unrolled (F_IN == 2).
    acc = b_ref[0] + w_ref[0] * x[0:1, :]             # (1, TB) on the VPU
    for k in range(1, f_in):
        acc = acc + w_ref[k] * x[k:k + 1, :]
    outT_ref[...] = acc.astype(outT_ref.dtype)


def _tile_defaults():
    """Generation-aware (tile_lanes, vmem_limit_bytes).

    Conservative VMEM footprint: (2, tb) input and (1, tb) output blocks are
    both sublane-padded to 8 rows and double-buffered -> ~128 * tb bytes.
    """
    kind = ""
    try:
        kind = jax.devices()[0].device_kind.lower()
    except Exception:
        pass
    if ("v5" in kind) or ("v6" in kind):
        # 128 MiB physical VMEM; raise the scoped limit (16/32 MiB default).
        return 256 * 1024, 100 << 20      # ~34 MiB double-buffered footprint
    # v7x (64 MiB physical VMEM) and unknown chips: conservative tile.
    # TODO(synk): on v7x, consider pipeline_mode=pl.Buffered(3) on the x spec
    # and pltpu.CORE_PARALLEL on the batch axis once verified in xprof.
    return 128 * 1024, 48 << 20           # ~17 MiB double-buffered footprint


def readiness_forward_transposed(x_t, weight, bias, *, tb=None,
                                 vmem_limit_bytes=None):
    """Pallas path. x_t: (F_in, B) f32 (batch on lanes). Returns (B, 1) f32."""
    f_in, B = x_t.shape
    assert weight.shape == (1, f_in) and bias.shape == (1,)

    tb_default, vmem_default = _tile_defaults()
    if tb is None:
        tb = tb_default
    if vmem_limit_bytes is None:
        vmem_limit_bytes = vmem_default

    lane = 128
    tb = max(lane, ((tb + lane - 1) // lane) * lane)   # multiple of 128 lanes
    b_ceil = ((B + lane - 1) // lane) * lane
    tb = min(tb, b_ceil)                               # don't over-tile tiny B
    num_tiles = pl.cdiv(B, tb)
    padded_b = num_tiles * tb                          # output allocation only

    w_flat = weight.reshape(f_in).astype(jnp.float32)  # (F_in,) SMEM scalars
    b_flat = bias.reshape(1).astype(jnp.float32)       # (1,)    SMEM scalar
    x_t = x_t.astype(jnp.float32)

    smem = pl.BlockSpec(memory_space=pltpu.MemorySpace.SMEM)

    out_t = pl.pallas_call(
        _readiness_kernel,
        out_shape=jax.ShapeDtypeStruct((1, padded_b), jnp.float32),
        grid=(num_tiles,),
        in_specs=[
            smem,                                           # weights (SMEM)
            smem,                                           # bias    (SMEM)
            # x tile, batch on lanes.  The boundary block (B % tb) is handled
            # by Pallas masking; its junk lanes are discarded by [:B] below.
            pl.BlockSpec((f_in, tb), lambda i: (0, i)),
        ],
        out_specs=pl.BlockSpec((1, tb), lambda i: (0, i)),  # lane-dense stores
        compiler_params=pltpu.CompilerParams(
            dimension_semantics=("parallel",),              # 2-TC shard on v7x
            vmem_limit_bytes=vmem_limit_bytes),
    )(w_flat, b_flat, x_t)

    return out_t[0, :B].reshape(B, 1)                       # slice + reshape, no .T


def readiness_forward(x, weight, bias, *, tb=None, small_batch_threshold=4096,
                      vmem_limit_bytes=None):
    """x: (B, F_in) f32; weight: (1, F_in) torch-Linear layout; bias: (1,).

    Returns (B, 1) f32, matching torch.nn.Linear(F_in, 1)(x) = x @ W.T + b.
    """
    B, f_in = x.shape
    assert weight.shape == (1, f_in) and bias.shape == (1,)

    # Small-batch bypass: custom-call launch + layout plumbing dwarf ~4 FLOPs
    # per row; a fused XLA linear wins below the crossover.
    if B < small_batch_threshold:
        return (x.astype(jnp.float32) @ weight.astype(jnp.float32).T
                + bias.astype(jnp.float32))

    # One cheap (B,2)->(2,B) transpose, no jnp.pad.  Producers that already
    # hold x batch-on-lanes should call readiness_forward_transposed directly.
    x_t = x.T.astype(jnp.float32)
    return readiness_forward_transposed(x_t, weight, bias, tb=tb,
                                        vmem_limit_bytes=vmem_limit_bytes)


if __name__ == "__main__":
    key = jax.random.PRNGKey(0)
    kx, kw, kb, kx2 = jax.random.split(key, 4)

    in_features = 2                         # ReadinessPredictor: nn.Linear(2, 1)
    # torch.nn.Linear stores weight as (out_features, in_features).
    weight = jax.random.normal(kw, (1, in_features), jnp.float32) * 0.5
    bias = jax.random.normal(kb, (1,), jnp.float32) * 0.5

    # 1) Nominal tiny batch -> small-batch bypass (plain fused XLA linear).
    x_small = jax.random.normal(kx, (8, in_features), jnp.float32)
    pred_small = readiness_forward(x_small, weight, bias)
    jax.block_until_ready(pred_small)
    assert pred_small.shape == (8, 1)
    assert jnp.allclose(pred_small, x_small @ weight.T + bias,
                        atol=1e-5, rtol=1e-5), "bypass mismatch"

    # 2) Force the Pallas path.  A small non-multiple-of-128 batch exercises
    #    the boundary-block masking and the lane-dense store path.
    x_kern = jax.random.normal(kx2, (333, in_features), jnp.float32)
    pred_kern = readiness_forward(x_kern, weight, bias, small_batch_threshold=0)
    jax.block_until_ready(pred_kern)
    assert pred_kern.shape == (333, 1)
    assert jnp.allclose(pred_kern, x_kern @ weight.T + bias,
                        atol=1e-5, rtol=1e-5), "pallas mismatch"

    print("KERNEL_OK")
</pallas_src>

<mosaic_0001>
module attributes {stable_mosaic.version = 11 : i64} {
  func.func @_readiness_kernel(%arg0: i32, %arg1: memref<2xf32, #tpu.memory_space<smem>>, %arg2: memref<1xf32, #tpu.memory_space<smem>>, %arg3: memref<2x384xf32, #tpu.memory_space<vmem>>, %arg4: memref<1x384xf32, #tpu.memory_space<vmem>>) attributes {dimension_semantics = [#tpu.dimension_semantics<parallel>], iteration_bounds = array<i64: 1>, scalar_prefetch = 0 : i64, scratch_operands = 0 : i64, tpu.core_type = #tpu.core_type<tc>, window_params = [{transform_indices = @transform_0, window_bounds = array<i64: 2>}, {transform_indices = @transform_1, window_bounds = array<i64: 1>}, {transform_indices = @transform_2, window_bounds = array<i64: 2, 384>}, {transform_indices = @transform_3, window_bounds = array<i64: 1, 384>}]} {
    %c0 = arith.constant 0 : index
    %c0_0 = arith.constant 0 : index
    %0 = vector.load %arg3[%c0, %c0_0] : memref<2x384xf32, #tpu.memory_space<vmem>>, vector<2x384xf32>
    %c0_1 = arith.constant 0 : index
    %1 = memref.load %arg2[%c0_1] : memref<1xf32, #tpu.memory_space<smem>>
    %c0_2 = arith.constant 0 : index
    %2 = memref.load %arg1[%c0_2] : memref<2xf32, #tpu.memory_space<smem>>
    %3 = vector.extract_strided_slice %0 {offsets = [0, 0], sizes = [1, 384], strides = [1, 1]} : vector<2x384xf32> to vector<1x384xf32>
    %4 = vector.broadcast %2 : f32 to vector<1x384xf32>
    %5 = arith.mulf %4, %3 : vector<1x384xf32>
    %6 = vector.broadcast %1 : f32 to vector<1x384xf32>
    %7 = arith.addf %6, %5 : vector<1x384xf32>
    %c1 = arith.constant 1 : index
    %8 = memref.load %arg1[%c1] : memref<2xf32, #tpu.memory_space<smem>>
    %9 = vector.extract_strided_slice %0 {offsets = [1, 0], sizes = [1, 384], strides = [1, 1]} : vector<2x384xf32> to vector<1x384xf32>
    %10 = vector.broadcast %8 : f32 to vector<1x384xf32>
    %11 = arith.mulf %10, %9 : vector<1x384xf32>
    %12 = arith.addf %7, %11 : vector<1x384xf32>
    %c0_3 = arith.constant 0 : index
    %c0_4 = arith.constant 0 : index
    %13 = vector.load %arg4[%c0_3, %c0_4] : memref<1x384xf32, #tpu.memory_space<vmem>>, vector<1x384xf32>
    tpu.vector_store %arg4[%c0_3, %c0_4], %12 {strides = array<i32>} : memref<1x384xf32, #tpu.memory_space<vmem>>, vector<1x384xf32>,
    return
  }
  func.func @transform_0(%arg0: i32) -> i32 {
    %c0_i32 = arith.constant 0 : i32
    %c0_i32_0 = arith.constant 0 : i32
    return %c0_i32 : i32
  }
  func.func @transform_1(%arg0: i32) -> i32 {
    %c0_i32 = arith.constant 0 : i32
    %c0_i32_0 = arith.constant 0 : i32
    return %c0_i32 : i32
  }
  func.func @transform_2(%arg0: i32) -> (i32, i32) {
    %c0_i32 = arith.constant 0 : i32
    %c0_i32_0 = arith.constant 0 : i32
    return %c0_i32, %arg0 : i32, i32
  }
  func.func @transform_3(%arg0: i32) -> (i32, i32) {
    %c0_i32 = arith.constant 0 : i32
    %c0_i32_0 = arith.constant 0 : i32
    return %c0_i32, %arg0 : i32, i32
  }
}

</mosaic_0001>

<llo_original>
// kernel: tpu_custom_call.1
$region0: #{tpu_custom_call.1}
  #allocation0 [shape = 'u32[]', space=smem, size = 0x4, offset = 0x4, fixed_abs, tag = 'smem constant byte address 0x4 - core index']
  #allocation1 [shape = 'u32[72,128]{1,0:T(1,128)}', space=vmem, size = 0x9000, scoped, tag = 'internal scratch']
  #allocation2 [shape = 'f32[1]{0:T(128)S(6)}', space=smem, size = 0x200, scoped, tag = 'scoped memory for tpu_custom_call.1']
  %s0 = inlined_call_operand.vmem [shape: f32[2], index: 0, kind: input, shape index: {}]
  %s1 = inlined_call_operand.<no memory space> [shape: f32[1], index: 1, kind: input, shape index: {}]
  %s2 = inlined_call_operand.hbm [shape: f32[2,333], index: 2, kind: input, shape index: {}]
  %s3 = inlined_call_operand.hbm [shape: f32[1,384], index: 3, kind: output, shape index: {}]
  %s4 = sld [smem:[#allocation0]]
  $region30: #{tpu_custom_call.1} parent=0
    _
  %s6 = ssub.s32 1, %s4
  %s7 = scalar_select 0, %s6, %s4
  %8 = sst [smem:[#allocation2]] %s1
  $region1: #{tpu_custom_call.1} parent=0
    #allocation3 [shape = 'u8[512]{0}', space=smem, size = 0x200, scoped, tag = 'input window, operand 0, single buffered']
    #allocation4 [shape = 's32[1]{0}', space=sflag, size = 0x4, scoped, tag = 'scoped memory for tpu_custom_call.1']
    #allocation5 [shape = 's32[1]{0}', space=sflag, size = 0x4, scoped, tag = 'scoped memory for tpu_custom_call.1']
    #allocation6 [shape = 's32[1]{0}', space=sflag, size = 0x4, scoped, tag = 'scoped memory for tpu_custom_call.1']
    #allocation7 [shape = 'u8[3072]{0}', space=vmem, size = 0xc00, scoped, tag = 'input window, operand 2, single buffered']
    #allocation8 [shape = 'u8[1536]{0}', space=vmem, size = 0x800, scoped, tag = 'output window, operand 0, single buffered']
    %9 = vsyncpa [#allocation6], 0
    %10 = vsyncpa [#allocation4], 0
    %11 = vsyncpa [#allocation5], 0
    // Predicated region
    $region2: #{tpu_custom_call.1} parent=1 // pred_check
      _
    $region3: #{tpu_custom_call.1} parent=1 // pred_check_branch
      %13 = sbr.rel (0) target = $region5
    $region4: #{tpu_custom_call.1} parent=1 // pred_region
      %15 = vsyncadd [#allocation6], 0
      %s17 = sshll.u32 %s0, 4
      %s18 = int_to_ptr.vmem [resolvable:$true] %s17
      %20 = dma.vmem_to_smem %s18, 16, [#allocation3], [#allocation6]
    $region5: #{tpu_custom_call.1} parent=1 // pred_fallthru
      _
    // Predicated region
    $region6: #{tpu_custom_call.1} parent=1 // pred_check
      _
    $region7: #{tpu_custom_call.1} parent=1 // pred_check_branch
      %22 = sbr.rel (0) target = $region9
    $region8: #{tpu_custom_call.1} parent=1 // pred_region
      _
    $region9: #{tpu_custom_call.1} parent=1 // pred_fallthru
      _
    // Predicated region
    $region10: #{tpu_custom_call.1} parent=1 // pred_check
      _
    $region11: #{tpu_custom_call.1} parent=1 // pred_check_branch
      %24 = sbr.rel (0) target = $region13
    $region12: #{tpu_custom_call.1} parent=1 // pred_region
      %26 = vsyncadd [#allocation4], 0
      %s28 = sshll.u32 %s2, 4
      %s29 = int_to_ptr.hbm [resolvable:$true] %s28
      %s30 = sshll.u32 [#allocation7], 4
      %s31 = int_to_ptr.vmem [resolvable:$true] %s30
      %33 = dma.hbm_to_vmem [thread:$0]  %s29, 96, %s31, [#allocation4]
    $region13: #{tpu_custom_call.1} parent=1 // pred_fallthru
      _
    // Predicated region
    $region14: #{tpu_custom_call.1} parent=1 // pred_check
      _
    $region15: #{tpu_custom_call.1} parent=1 // pred_check_branch
      %35 = sbr.rel (0) target = $region17
    $region16: #{tpu_custom_call.1} parent=1 // pred_region
      %37 = dma.done [#allocation6], 16
    $region17: #{tpu_custom_call.1} parent=1 // pred_fallthru
      _
    // Predicated region
    $region18: #{tpu_custom_call.1} parent=1 // pred_check
      _
    $region19: #{tpu_custom_call.1} parent=1 // pred_check_branch
      %39 = sbr.rel (0) target = $region21
    $region20: #{tpu_custom_call.1} parent=1 // pred_region
      %41 = dma.done [#allocation4], 96
    $region21: #{tpu_custom_call.1} parent=1 // pred_fallthru
      _
    %42 = sfence
    %v43 = vld [vmem:[#allocation7] sm:$0x3f]
    %s44 = sld [smem:[#allocation2]]
    %s45 = sld [smem:[#allocation3]]
    %v46 = vstv %s45
    %v47 = vmul.f32 %v46, %v43
    %v48 = vstv %s44
    %v49 = vadd.f32 %v48, %v47
    %s50 = sld [smem:[#allocation3 + $0x1]]
    %v51 = vstv %s50
    %v52 = vmul.f32 %v51, %v43
    %v54 = vrot.slane %v52, 7
    %v55 = vrot.slane %v54, 2
    %v57 = vadd.f32 %v49, %v55
    %v59 = vrot.slane %v57, 1
    %v60 = vrot.slane %v57, 2
    %v61 = vrot.slane %v57, 3
    %vm62 = vcmask 1040384
    %v63 = vsel %vm62, %v57, %v59
    %vm64 = vcmask 1042434
    %v65 = vsel %vm64, %v60, %v61
    %vm66 = vcmask 1041408
    %v67 = vsel %vm66, %v63, %v65
    %v69 = vlaneseq
    %vm70 = vcmp.ge.s32.totalorder %v69, 0
    %vm71 = vcmp.lt.s32.totalorder %v69, 384
    %vm72 = vmand %vm70, %vm71
    %73 = vst.msk [vmem:[#allocation8] sm:$0x7] %vm72, %v67
    // Predicated region
    $region22: #{tpu_custom_call.1} parent=1 // pred_check
      _
    $region23: #{tpu_custom_call.1} parent=1 // pred_check_branch
      %75 = sbr.rel (0) target = $region25
    $region24: #{tpu_custom_call.1} parent=1 // pred_region
      %77 = vsyncadd [#allocation5], 0
      %s79 = sshll.u32 [#allocation8], 4
      %s80 = int_to_ptr.vmem [resolvable:$true] %s79
      %s81 = sshll.u32 %s3, 4
      %s82 = int_to_ptr.hbm [resolvable:$true] %s81
      %84 = dma.vmem_to_hbm [thread:$0]  %s80, 48, %s82, [#allocation5]
    $region25: #{tpu_custom_call.1} parent=1 // pred_fallthru
      _
    // Predicated region
    $region26: #{tpu_custom_call.1} parent=1 // pred_check
      _
    $region27: #{tpu_custom_call.1} parent=1 // pred_check_branch
      %86 = sbr.rel (0) target = $region29
    $region28: #{tpu_custom_call.1} parent=1 // pred_region
      %88 = dma.done [#allocation5], 48
    $region29: #{tpu_custom_call.1} parent=1 // pred_fallthru
      _
    %89 = vsyncpa [#allocation4], 1
    %90 = vsyncpa [#allocation5], 1
    %91 = vsyncpa [#allocation6], 1

</llo_original>
